<compile_context>
chip_gen: v6e
topology: v6e:2x2x1
jax: 0.10.0
libtpu: 0.0.40
codegen_flags: <defaults>
</compile_context>

<pallas_src>
import jax
import jax.numpy as jnp
from jax.experimental import pallas as pl
from jax.experimental.pallas import tpu as pltpu

_TILE_TARGET_BYTES = 4 << 20     # ~4 MiB per input block
_VMEM_LIMIT_BYTES = 32 << 20     # safe on v5e/v6e/v7x (physical VMEM >= 64 MiB)


def _vdrop_kernel(x_ref, m_ref, o_ref):
    """o = x * scaled_keep_mask; the mask broadcasts along the time axis."""
    o_ref[...] = (x_ref[...] * m_ref[...]).astype(o_ref.dtype)


def _round_up(x: int, m: int) -> int:
    return ((x + m - 1) // m) * m


def _tiles_time_major(T, F, itemsize, target=_TILE_TARGET_BYTES):
    """Block sizes (tt, tf) for a (T, F) array, where F = B*D (flattened)."""
    row_bytes = max(F * itemsize, 1)
    if row_bytes >= target:
        # One time row is already big: take few rows, split the feature axis.
        tt = T if T < 8 else 8
        tf = min(F, max(128, ((target // max(tt * itemsize, 1)) // 128) * 128))
    else:
        tf = F
        tt = min(T, max(1, target // row_bytes))
        if tt < T:
            tt = (tt // 8) * 8
            if tt < 8:
                tt = min(T, 8)        # smallest legal sub-block height
            if tt >= T:
                tt = T
    # Force >= 2 grid steps when possible (megacore sharding + DMA overlap).
    if tt >= T and tf >= F:
        if T >= 16:
            new_tt = _round_up((T + 1) // 2, 8)
            if new_tt < T:
                tt = new_tt
            elif F >= 256:
                tf = _round_up((F + 1) // 2, 128)
        elif F >= 256:
            tf = _round_up((F + 1) // 2, 128)
    return tt, tf


def _tiles_batch_major(B, T, D, itemsize, target=_TILE_TARGET_BYTES):
    """Block sizes (tb, tt) for a (B, T, D) array (full D per block)."""
    d_bytes = max(D * itemsize, 1)
    tt = min(T, max(1, target // d_bytes))
    if tt < T:
        tt = (tt // 8) * 8
        if tt < 8:
            tt = min(T, 8)            # smallest legal sub-block height
        if tt >= T:
            tt = T
    tb = min(B, max(1, target // max(tt * d_bytes, 1)))
    # Force >= 2 grid steps when possible (megacore sharding + DMA overlap).
    if tb >= B and tt >= T:
        if B >= 2:
            tb = (B + 1) // 2
        elif T >= 16:
            new_tt = _round_up((T + 1) // 2, 8)
            if new_tt < T:
                tt = new_tt
    # TODO(synk): if a single (1, 8, D) slab ever exceeded the VMEM budget a
    # third grid axis over D would be needed; not realistic for RNN widths.
    return tb, tt


def _as_key(seed):
    """Accept python/numpy ints, traced int scalars, typed keys or raw keys."""
    if hasattr(seed, "dtype"):
        if jnp.issubdtype(seed.dtype, jax.dtypes.prng_key):
            return seed
        if getattr(seed, "shape", None) == (2,) and jnp.issubdtype(
                seed.dtype, jnp.unsignedinteger):
            return seed                # legacy raw uint32[2] key
    return jax.random.PRNGKey(seed)


def variational_dropout(x, seed, dropout: float, *, batch_first: bool = False,
                        training: bool = True):
    """JAX/Pallas equivalent of VariationalDropout.forward.

    x:    (T, B, D) if batch_first=False, else (B, T, D)
    seed: int / traced int / jax PRNG key used to sample the shared mask
    """
    if (not training) or dropout <= 0.0:
        return x

    keep_prob = 1.0 - float(dropout)
    key = _as_key(seed)
    mask_dtype = x.dtype if x.dtype == jnp.bfloat16 else jnp.float32
    itemsize = jnp.dtype(x.dtype).itemsize
    params = pltpu.CompilerParams(
        dimension_semantics=("parallel", "parallel"),
        vmem_limit_bytes=_VMEM_LIMIT_BYTES)

    if batch_first:
        B, T, D = x.shape
        keep = jax.random.bernoulli(key, p=keep_prob, shape=(B, 1, D))
        mask = jnp.where(keep, 1.0 / keep_prob, 0.0).astype(mask_dtype)
        tb, tt = _tiles_batch_major(B, T, D, itemsize)
        grid = (pl.cdiv(B, tb), pl.cdiv(T, tt))
        return pl.pallas_call(
            _vdrop_kernel,
            out_shape=jax.ShapeDtypeStruct((B, T, D), x.dtype),
            grid=grid,
            in_specs=[pl.BlockSpec((tb, tt, D), lambda b, t: (b, t, 0)),
                      pl.BlockSpec((tb, 1, D), lambda b, t: (b, 0, 0))],
            out_specs=pl.BlockSpec((tb, tt, D), lambda b, t: (b, t, 0)),
            compiler_params=params,
        )(x, mask)

    # batch_first=False: (T, B, D).  Flatten to (T, B*D) so the output is
    # lane-dense (wide unmasked stores) no matter what B and D are.
    T, B, D = x.shape
    F = B * D
    keep = jax.random.bernoulli(key, p=keep_prob, shape=(1, B, D))
    mask = jnp.where(keep, 1.0 / keep_prob, 0.0).astype(mask_dtype).reshape(1, F)
    x2d = x.reshape(T, F)                      # contiguous reshape: free
    tt, tf = _tiles_time_major(T, F, itemsize)
    grid = (pl.cdiv(T, tt), pl.cdiv(F, tf))
    out2d = pl.pallas_call(
        _vdrop_kernel,
        out_shape=jax.ShapeDtypeStruct((T, F), x.dtype),
        grid=grid,
        in_specs=[pl.BlockSpec((tt, tf), lambda t, f: (t, f)),
                  pl.BlockSpec((1, tf), lambda t, f: (0, f))],
        out_specs=pl.BlockSpec((tt, tf), lambda t, f: (t, f)),
        compiler_params=params,
    )(x2d, mask)
    return out2d.reshape(T, B, D)


if __name__ == "__main__":
    import numpy as np

    dropout = 0.3
    scale = 1.0 / (1.0 - dropout)

    def check(xn, yn, time_axis):
        safe_x = np.where(xn != 0.0, xn, 1.0)
        ratio = np.where(xn != 0.0, yn / safe_x, 0.0)   # 0 or 1/(1-p)
        keep = ratio > 0.5
        ref = np.take(keep, [0], axis=time_axis)
        assert np.all(keep == ref), "mask differs across time steps"
        assert np.allclose(ratio[keep], scale, rtol=1e-5), "wrong dropout scaling"
        assert np.all(yn[~keep] == 0.0), "dropped elements not zero"

    key = jax.random.PRNGKey(0)

    # ---- (T, B, D) = (8, 8, 128), batch_first=False (feature-split grid).
    x = jax.random.normal(key, (8, 8, 128), dtype=jnp.float32)
    y = jax.block_until_ready(
        variational_dropout(x, seed=42, dropout=dropout, training=True))
    check(np.asarray(x), np.asarray(y), time_axis=0)

    # ---- longer sequence (T, B, D) = (64, 4, 128): exercises time-split grid.
    xl = jax.random.normal(jax.random.PRNGKey(1), (64, 4, 128), dtype=jnp.float32)
    yl = jax.block_until_ready(
        variational_dropout(xl, seed=3, dropout=dropout, training=True))
    check(np.asarray(xl), np.asarray(yl), time_axis=0)

    # ---- batch_first=True, (B, T, D) = (8, 8, 128): batch-split grid.
    xb = jnp.transpose(x, (1, 0, 2))
    yb = jax.block_until_ready(
        variational_dropout(xb, seed=7, dropout=dropout,
                            batch_first=True, training=True))
    check(np.asarray(xb), np.asarray(yb), time_axis=1)

    # ---- eval mode is identity.
    y_eval = variational_dropout(x, seed=42, dropout=dropout, training=False)
    assert np.array_equal(np.asarray(y_eval), np.asarray(x))

    print("KERNEL_OK")
</pallas_src>

<mosaic_0001>
module attributes {stable_mosaic.version = 11 : i64} {
  func.func @_vdrop_kernel(%arg0: i32, %arg1: i32, %arg2: memref<8x512xf32, #tpu.memory_space<vmem>>, %arg3: memref<1x512xf32, #tpu.memory_space<vmem>>, %arg4: memref<8x512xf32, #tpu.memory_space<vmem>>) attributes {dimension_semantics = [#tpu.dimension_semantics<parallel>, #tpu.dimension_semantics<parallel>], iteration_bounds = array<i64: 1, 2>, scalar_prefetch = 0 : i64, scratch_operands = 0 : i64, tpu.core_type = #tpu.core_type<tc>, window_params = [{transform_indices = @transform_0, window_bounds = array<i64: 8, 512>}, {transform_indices = @transform_1, window_bounds = array<i64: 1, 512>}, {transform_indices = @transform_2, window_bounds = array<i64: 8, 512>}]} {
    %c0 = arith.constant 0 : index
    %c0_0 = arith.constant 0 : index
    %0 = vector.load %arg2[%c0, %c0_0] : memref<8x512xf32, #tpu.memory_space<vmem>>, vector<8x512xf32>
    %c0_1 = arith.constant 0 : index
    %c0_2 = arith.constant 0 : index
    %1 = vector.load %arg3[%c0_1, %c0_2] : memref<1x512xf32, #tpu.memory_space<vmem>>, vector<1x512xf32>
    %2 = vector.broadcast %1 : vector<1x512xf32> to vector<8x512xf32>
    %3 = arith.mulf %0, %2 : vector<8x512xf32>
    %c0_3 = arith.constant 0 : index
    %c0_4 = arith.constant 0 : index
    %4 = vector.load %arg4[%c0_3, %c0_4] : memref<8x512xf32, #tpu.memory_space<vmem>>, vector<8x512xf32>
    tpu.vector_store %arg4[%c0_3, %c0_4], %3 {strides = array<i32>} : memref<8x512xf32, #tpu.memory_space<vmem>>, vector<8x512xf32>,
    return
  }
  func.func @transform_0(%arg0: i32, %arg1: i32) -> (i32, i32) {
    %c0_i32 = arith.constant 0 : i32
    return %arg0, %arg1 : i32, i32
  }
  func.func @transform_1(%arg0: i32, %arg1: i32) -> (i32, i32) {
    %c0_i32 = arith.constant 0 : i32
    %c0_i32_0 = arith.constant 0 : i32
    return %c0_i32, %arg1 : i32, i32
  }
  func.func @transform_2(%arg0: i32, %arg1: i32) -> (i32, i32) {
    %c0_i32 = arith.constant 0 : i32
    return %arg0, %arg1 : i32, i32
  }
}

</mosaic_0001>

<llo_original>
// kernel: tpu_custom_call.1
$region0: #{tpu_custom_call.1}
  #allocation0 [shape = 'u32[]', space=smem, size = 0x4, offset = 0x4, fixed_abs, tag = 'smem constant byte address 0x4 - core index']
  #allocation1 [shape = 'u32[144,128]{1,0:T(1,128)}', space=vmem, size = 0x12000, scoped, tag = 'internal scratch']
  %s0 = inlined_call_operand.hbm [shape: f32[8,1024], index: 0, kind: input, shape index: {}]
  %s1 = inlined_call_operand.hbm [shape: f32[1,1024], index: 1, kind: input, shape index: {}]
  %s2 = inlined_call_operand.hbm [shape: f32[8,1024], index: 2, kind: output, shape index: {}]
  %s3 = sld [smem:[#allocation0]]
  $region49: #{tpu_custom_call.1} parent=0
    _
  %s5 = ssub.s32 1, %s3
  %s6 = scalar_select 0, %s5, %s3
  $region1: #{tpu_custom_call.1} parent=0
    #allocation2 [shape = 'u8[32768]{0}', space=vmem, size = 0x8000, scoped, tag = 'input window, operand 0']
    #allocation3 [shape = 's32[2]{0}', space=sflag, size = 0x8, scoped, tag = 'scoped memory for tpu_custom_call.1']
    #allocation4 [shape = 's32[2]{0}', space=sflag, size = 0x8, scoped, tag = 'scoped memory for tpu_custom_call.1']
    #allocation5 [shape = 'u8[4096]{0}', space=vmem, size = 0x1000, scoped, tag = 'input window, operand 1']
    #allocation6 [shape = 's32[2]{0}', space=sflag, size = 0x8, scoped, tag = 'scoped memory for tpu_custom_call.1']
    #allocation7 [shape = 'u8[32768]{0}', space=vmem, size = 0x8000, scoped, tag = 'output window, operand 0']
    %7 = vsyncpa [#allocation3], 0
    %s8 = scalar_lea.sflag [#allocation3], 1
    %9 = vsyncpa %s8, 0
    %10 = vsyncpa [#allocation6], 0
    %s11 = scalar_lea.sflag [#allocation6], 1
    %12 = vsyncpa %s11, 0
    %13 = vsyncpa [#allocation4], 0
    %s14 = scalar_lea.sflag [#allocation4], 1
    %15 = vsyncpa %s14, 0
    loop: start=0, step=1, limit=4
    $region2: #{tpu_custom_call.1} parent=1 // loop_pre_header
      _
    $region3: #{tpu_custom_call.1} parent=1 // loop_header
      %s17 = sphi 0, %s21
      %p18 = scmp.ge.s32.totalorder %s17, 4
      %s24 = sphi 0, %s36
      %s25 = sphi 0, %s32
      %s26 = sphi 0, %s24
      %s27 = sphi 0, %s25
      %s28 = sphi 0, %s26
      %s29 = sphi 0, %s27
      %s41 = sphi 0, %s43
      %s44 = sphi 0, %s41
      %s45 = sphi 0, %s44
      %s61 = sphi 0, %s45
      %s67 = sphi 0, %s69
      %s70 = sphi 0, %s67
      %s71 = sphi 0, %s70
      %s87 = sphi 0, %s71
      %s95 = sphi 0, %s97
      %s98 = sphi 0, %s95
      %s99 = sphi 0, %s98
      %s115 = sphi 0, %s99
    $region4: #{tpu_custom_call.1} parent=1 // loop_header_branch
      %20 = sbr.rel (%p18) target = $region8
    $region5: #{tpu_custom_call.1} parent=1 // loop_body
      %s22 = ssub.s32 %s17, 1
      %s23 = ssub.s32 %s17, 2
      %s30 = sadd.s32 1, %s25
      %p31 = scmp.ge.s32.totalorder %s30, 2
      %s32 = scalar_select %p31, 0, %s30
      %s33 = sadd.s32 1, %s24
      %s34 = scalar_select %p31, %s33, %s24
      %p35 = scmp.ge.s32.totalorder %s34, 1
      %s36 = scalar_select %p35, 0, %s34
      %s37 = ssub.s32 %s24, %s36
      %s38 = ssub.s32 %s25, %s32
      %s39 = sor.u32 %s37, %s38
      %p40 = scmp.eq.s32.totalorder %s39, 0
      %s42 = sadd.s32 %s41, 1
      %s43 = scalar_select %p40, %s41, %s42
      %p46 = pneg %p40
      %p47 = scmp.eq.s32.totalorder %s17, 1
      %p48 = por %p46, %p47
      %p49 = scmp.ne.s32.totalorder %s41, %s44
      %p50 = scmp.eq.s32.totalorder %s17, 0
      %p51 = por %p49, %p50
      %p52 = scmp.ne.s32.totalorder %s41, %s44
      %p53 = scmp.eq.s32.totalorder %s22, 1
      %p54 = por %p52, %p53
      %p55 = scmp.ne.s32.totalorder %s44, %s45
      %p56 = scmp.eq.s32.totalorder %s22, 0
      %p57 = por %p55, %p56
      %p58 = scmp.ne.s32.totalorder %s44, %s45
      %p59 = scmp.eq.s32.totalorder %s23, 1
      %p60 = por %p58, %p59
      %p62 = scmp.ne.s32.totalorder %s45, %s61
      %p63 = scmp.eq.s32.totalorder %s23, 0
      %p64 = por %p62, %p63
      %s65 = ssub.s32 %s25, %s32
      %p66 = scmp.eq.s32.totalorder %s65, 0
      %s68 = sadd.s32 %s67, 1
      %s69 = scalar_select %p66, %s67, %s68
      %p72 = pneg %p66
      %p73 = scmp.eq.s32.totalorder %s17, 1
      %p74 = por %p72, %p73
      %p75 = scmp.ne.s32.totalorder %s67, %s70
      %p76 = scmp.eq.s32.totalorder %s17, 0
      %p77 = por %p75, %p76
      %p78 = scmp.ne.s32.totalorder %s67, %s70
      %p79 = scmp.eq.s32.totalorder %s22, 1
      %p80 = por %p78, %p79
      %p81 = scmp.ne.s32.totalorder %s70, %s71
      %p82 = scmp.eq.s32.totalorder %s22, 0
      %p83 = por %p81, %p82
      %p84 = scmp.ne.s32.totalorder %s70, %s71
      %p85 = scmp.eq.s32.totalorder %s23, 1
      %p86 = por %p84, %p85
      %p88 = scmp.ne.s32.totalorder %s71, %s87
      %p89 = scmp.eq.s32.totalorder %s23, 0
      %p90 = por %p88, %p89
      %s91 = ssub.s32 %s24, %s36
      %s92 = ssub.s32 %s25, %s32
      %s93 = sor.u32 %s91, %s92
      %p94 = scmp.eq.s32.totalorder %s93, 0
      %s96 = sadd.s32 %s95, 1
      %s97 = scalar_select %p94, %s95, %s96
      %p100 = pneg %p94
      %p101 = scmp.eq.s32.totalorder %s17, 1
      %p102 = por %p100, %p101
      %p103 = scmp.ne.s32.totalorder %s95, %s98
      %p104 = scmp.eq.s32.totalorder %s17, 0
      %p105 = por %p103, %p104
      %p106 = scmp.ne.s32.totalorder %s95, %s98
      %p107 = scmp.eq.s32.totalorder %s22, 1
      %p108 = por %p106, %p107
      %p109 = scmp.ne.s32.totalorder %s98, %s99
      %p110 = scmp.eq.s32.totalorder %s22, 0
      %p111 = por %p109, %p110
      %p112 = scmp.ne.s32.totalorder %s98, %s99
      %p113 = scmp.eq.s32.totalorder %s23, 1
      %p114 = por %p112, %p113
      %p116 = scmp.ne.s32.totalorder %s99, %s115
      %p117 = scmp.eq.s32.totalorder %s23, 0
      %p118 = por %p116, %p117
      %p119 = scmp.le.s32.totalorder 1, %s17
      %p120 = scmp.lt.s32.totalorder %s17, 3
      %p121 = pnand %p119, %p120
      %p122 = pneg %p121
      // Predicated region
      $region9: #{tpu_custom_call.1} parent=5 // pred_check
        _
      $region10: #{tpu_custom_call.1} parent=5 // pred_check_branch
        %124 = sbr.rel (%p121) target = $region12
      $region11: #{tpu_custom_call.1} parent=5 // pred_region
        %s125 = ssub.s32 %s17, 1
      $region12: #{tpu_custom_call.1} parent=5 // pred_fallthru
        _
      %p126 = scmp.lt.s32.totalorder %s17, 2
      // Predicated region
      $region13: #{tpu_custom_call.1} parent=5 // pred_check
        %p127 = pneg %p126
      $region14: #{tpu_custom_call.1} parent=5 // pred_check_branch
        %129 = sbr.rel (%p127) target = $region16
      $region15: #{tpu_custom_call.1} parent=5 // pred_region
        // Predicated region
        $region17: #{tpu_custom_call.1} parent=15 // pred_check
          %p130 = pneg %p51
        $region18: #{tpu_custom_call.1} parent=15 // pred_check_branch
          %132 = sbr.rel (%p130) target = $region20
        $region19: #{tpu_custom_call.1} parent=15 // pred_region
          %s133 = sand.u32 %s41, 1
          %s134 = scalar_lea.sflag [#allocation3], %s133
          %s135 = sand.u32 %s41, 1
          %s136 = smul.addr %s135, 32
          %s137 = scalar_lea.vmem [#allocation2], %s136
          %s138 = smul.u32 4, %s25
          %s140 = ssub.s32 512, 512
          %141 = vsyncadd %s134, %s140
          %s142 = smul.addr %s24, 8
          %s143 = sadd.s32 %s138, %s142
          %s144 = smul.addr %s143, 128
          %s145 = scalar_lea.hbm %s0, %s144
          %s147 = sshll.u32 %s137, 4
          %s148 = int_to_ptr.vmem [resolvable:$true] %s147
          %150 = dma.hbm_to_vmem [thread:$0]  %s145, 512, %s148, %s134
        $region20: #{tpu_custom_call.1} parent=15 // pred_fallthru
          _
        // Predicated region
        $region21: #{tpu_custom_call.1} parent=15 // pred_check
          %p151 = pneg %p77
        $region22: #{tpu_custom_call.1} parent=15 // pred_check_branch
          %153 = sbr.rel (%p151) target = $region24
        $region23: #{tpu_custom_call.1} parent=15 // pred_region
          %s154 = sand.u32 %s67, 1
          %s155 = scalar_lea.sflag [#allocation6], %s154
          %s156 = sand.u32 %s67, 1
          %s157 = smul.addr %s156, 4
          %s158 = scalar_lea.vmem [#allocation5], %s157
          %s159 = smul.u32 4, %s25
          %s161 = ssub.s32 64, 64
          %162 = vsyncadd %s155, %s161
          %s163 = smul.addr %s159, 16
          %s164 = scalar_lea.hbm %s1, %s163
          %s166 = sshll.u32 %s158, 4
          %s167 = int_to_ptr.vmem [resolvable:$true] %s166
          %169 = dma.hbm_to_vmem [thread:$0]  %s164, 64, %s167, %s155
        $region24: #{tpu_custom_call.1} parent=15 // pred_fallthru
          _
      $region16: #{tpu_custom_call.1} parent=5 // pred_fallthru
        _
      %p170 = scmp.le.s32.totalorder 1, %s17
      %p171 = scmp.lt.s32.totalorder %s17, 3
      %p172 = pnand %p170, %p171
      %p173 = pneg %p172
      // Predicated region
      $region25: #{tpu_custom_call.1} parent=5 // pred_check
        _
      $region26: #{tpu_custom_call.1} parent=5 // pred_check_branch
        %175 = sbr.rel (%p172) target = $region28
      $region27: #{tpu_custom_call.1} parent=5 // pred_region
        %s176 = ssub.s32 %s17, 1
        %s177 = sand.u32 %s44, 1
        %s178 = scalar_lea.sflag [#allocation3], %s177
        %s179 = sand.u32 %s44, 1
        %s180 = smul.addr %s179, 32
        %s181 = scalar_lea.vmem [#allocation2], %s180
        // Predicated region
        $region29: #{tpu_custom_call.1} parent=27 // pred_check
          %p182 = pneg %p57
        $region30: #{tpu_custom_call.1} parent=27 // pred_check_branch
          %184 = sbr.rel (%p182) target = $region32
        $region31: #{tpu_custom_call.1} parent=27 // pred_region
          %185 = dma.done %s178, 512
        $region32: #{tpu_custom_call.1} parent=27 // pred_fallthru
          _
        %s186 = sand.u32 %s70, 1
        %s187 = scalar_lea.sflag [#allocation6], %s186
        %s188 = sand.u32 %s70, 1
        %s189 = smul.addr %s188, 4
        %s190 = scalar_lea.vmem [#allocation5], %s189
        // Predicated region
        $region33: #{tpu_custom_call.1} parent=27 // pred_check
          %p191 = pneg %p83
        $region34: #{tpu_custom_call.1} parent=27 // pred_check_branch
          %193 = sbr.rel (%p191) target = $region36
        $region35: #{tpu_custom_call.1} parent=27 // pred_region
          %194 = dma.done %s187, 64
        $region36: #{tpu_custom_call.1} parent=27 // pred_fallthru
          _
        %s195 = sand.u32 %s44, 1
        %s196 = scalar_lea.sflag [#allocation3], %s195
        %s197 = sand.u32 %s44, 1
        %s198 = smul.addr %s197, 32
        %s199 = scalar_lea.vmem [#allocation2], %s198
        %p200 = pneg %p57
        %p201 = pneg %p54
        %s202 = sand.u32 %s70, 1
        %s203 = scalar_lea.sflag [#allocation6], %s202
        %s204 = sand.u32 %s70, 1
        %s205 = smul.addr %s204, 4
        %s206 = scalar_lea.vmem [#allocation5], %s205
        %p207 = pneg %p83
        %p208 = pneg %p80
        %p209 = pneg %p111
        %p210 = pneg %p108
        %s211 = sand.u32 %s98, 1
        %s212 = scalar_lea.sflag [#allocation4], %s211
        %s213 = sand.u32 %s98, 1
        %s214 = smul.addr %s213, 32
        %s215 = scalar_lea.vmem [#allocation7], %s214
        %s216 = smul.u32 4, %s27
        %s217 = smul.u32 4, %s27
        %s218 = smul.u32 4, %s27
        %v219 = vld [vmem:[%s181] sm:$0xff]
        %v220 = vld [vmem:[%s181 + $0x8] sm:$0xff]
        %v221 = vld [vmem:[%s181 + $0x10] sm:$0xff]
        %v222 = vld [vmem:[%s181 + $0x18] sm:$0xff]
        %v223 = vld [vmem:[%s190] sm:$0xf]
        %v225 = vlaneseq
        %v226 = vshrl.u32 %v225, 7
        %v227 = vsub.s32 0, %v226
        %v228 = vrot.slane %v223, %v227
        %v229 = vlaneseq
        %v230 = vshrl.u32 %v229, 7
        %v231 = vsub.s32 1, %v230
        %v232 = vrot.slane %v223, %v231
        %v233 = vlaneseq
        %v234 = vshrl.u32 %v233, 7
        %v235 = vsub.s32 2, %v234
        %v236 = vrot.slane %v223, %v235
        %v237 = vlaneseq
        %v238 = vshrl.u32 %v237, 7
        %v239 = vsub.s32 3, %v238
        %v240 = vrot.slane %v223, %v239
        %v245 = vmul.f32 %v219, %v228
        %v246 = vmul.f32 %v220, %v232
        %v247 = vmul.f32 %v221, %v236
        %v248 = vmul.f32 %v222, %v240
        %249 = vst [vmem:[%s215] sm:$0xff] %v245
        %250 = vst [vmem:[%s215 + $0x8] sm:$0xff] %v246
        %251 = vst [vmem:[%s215 + $0x10] sm:$0xff] %v247
        %252 = vst [vmem:[%s215 + $0x18] sm:$0xff] %v248
        %s253 = sand.u32 %s98, 1
        %s254 = scalar_lea.sflag [#allocation4], %s253
        %s255 = sand.u32 %s98, 1
        %s256 = smul.addr %s255, 32
        %s257 = scalar_lea.vmem [#allocation7], %s256
        // Predicated region
        $region37: #{tpu_custom_call.1} parent=27 // pred_check
          %p258 = pneg %p108
        $region38: #{tpu_custom_call.1} parent=27 // pred_check_branch
          %260 = sbr.rel (%p258) target = $region40
        $region39: #{tpu_custom_call.1} parent=27 // pred_region
          %s261 = smul.u32 4, %s27
          %s263 = ssub.s32 512, 512
          %264 = vsyncadd %s254, %s263
          %s265 = smul.addr %s26, 8
          %s266 = sadd.s32 %s261, %s265
          %s267 = smul.addr %s266, 128
          %s268 = scalar_lea.hbm %s2, %s267
          %s270 = sshll.u32 %s257, 4
          %s271 = int_to_ptr.vmem [resolvable:$true] %s270
          %273 = dma.vmem_to_hbm [thread:$0]  %s271, 512, %s268, %s254
        $region40: #{tpu_custom_call.1} parent=27 // pred_fallthru
          _
      $region28: #{tpu_custom_call.1} parent=5 // pred_fallthru
        _
      %p274 = scmp.le.s32.totalorder 2, %s17
      // Predicated region
      $region41: #{tpu_custom_call.1} parent=5 // pred_check
        %p275 = pneg %p274
      $region42: #{tpu_custom_call.1} parent=5 // pred_check_branch
        %277 = sbr.rel (%p275) target = $region44
      $region43: #{tpu_custom_call.1} parent=5 // pred_region
        %s278 = ssub.s32 %s17, 2
        // Predicated region
        $region45: #{tpu_custom_call.1} parent=43 // pred_check
          %p279 = pneg %p114
        $region46: #{tpu_custom_call.1} parent=43 // pred_check_branch
          %281 = sbr.rel (%p279) target = $region48
        $region47: #{tpu_custom_call.1} parent=43 // pred_region
          %s282 = sand.u32 %s99, 1
          %s283 = scalar_lea.sflag [#allocation4], %s282
          %s284 = sand.u32 %s99, 1
          %s285 = smul.addr %s284, 32
          %s286 = scalar_lea.vmem [#allocation7], %s285
          %287 = dma.done %s283, 512
        $region48: #{tpu_custom_call.1} parent=43 // pred_fallthru
          _
      $region44: #{tpu_custom_call.1} parent=5 // pred_fallthru
        _
    $region6: #{tpu_custom_call.1} parent=1 // loop_footer
      %s21 = sadd.s32 1, %s17
    $region7: #{tpu_custom_call.1} parent=1 // loop_footer_branch
      %16 = sbr.rel target = $region3
    $region8: #{tpu_custom_call.1} parent=1 // loop_exit
      _
    %288 = vsyncpa [#allocation3], 1
    %s289 = scalar_lea.sflag [#allocation3], 1
    %290 = vsyncpa %s289, 1
    %291 = vsyncpa [#allocation6], 1
    %s292 = scalar_lea.sflag [#allocation6], 1
    %293 = vsyncpa %s292, 1
    %294 = vsyncpa [#allocation4], 1
    %s295 = scalar_lea.sflag [#allocation4], 1
    %296 = vsyncpa %s295, 1

</llo_original>
